<compile_context>
chip_gen: v5e
topology: v5e:2x2
jax: 0.10.0
libtpu: 0.0.40
codegen_flags: <defaults>
</compile_context>

<pallas_src>
import functools
import math

import jax
import jax.numpy as jnp
from jax.experimental import pallas as pl
from jax.experimental.pallas import tpu as pltpu


# ---------------------------------------------------------------------------
# helpers
# ---------------------------------------------------------------------------

def _round_up(x, m):
    return -(-x // m) * m


def _round_down(x, m):
    return max(m, (x // m) * m)


def _sublanes(dtype):
    return {4: 8, 2: 16, 1: 32}.get(jnp.dtype(dtype).itemsize, 8)


def _padded_bytes(shape, dtype):
    """VMEM bytes of an array once padded to the physical (sublane, lane) tile."""
    item = jnp.dtype(dtype).itemsize
    shape = tuple(int(s) for s in shape)
    if len(shape) == 1:
        shape = (1,) + shape
    lead = 1
    for s in shape[:-2]:
        lead *= s
    return (lead * _round_up(shape[-2], _sublanes(dtype))
            * _round_up(shape[-1], 128) * item)


def _vmem_budget_and_limit():
    """Generation-aware VMEM numbers (v5e/v6e: 128 MiB physical, v7x: 64 MiB)."""
    cap = 128 * 1024 * 1024
    try:
        cap = int(pltpu.get_tpu_info().vmem_capacity_bytes)
    except Exception:
        pass
    limit = int(min(cap * 3 // 4, 96 * 1024 * 1024))   # scoped limit we request
    budget = int(cap // 2)                             # what tile sizing may plan on
    return budget, limit


def _target_mxu_depth():
    """256-deep contractions on v6e/v7x (2x256^2 MXU); 128 on v5e (4x128^2)."""
    try:
        kind = jax.devices()[0].device_kind.lower()
        if "v5 lite" in kind or "v5e" in kind or "v5litepod" in kind:
            return 128
    except Exception:
        pass
    return 256


# ---------------------------------------------------------------------------
# kernels
# ---------------------------------------------------------------------------

def _matmul_kernel(p_ref, w_ref, o_ref):
    # p_ref: (TM, Dp)  im2col patches      (compute dtype)
    # w_ref: (Dp, Coutp) binarized weights (compute dtype, resident, 1-buffered)
    # o_ref: (TM, Coutp) flat output tile
    o_ref[...] = jnp.dot(p_ref[...], w_ref[...],
                         preferred_element_type=jnp.float32).astype(o_ref.dtype)


def _direct_kernel(x_ref, w_ref, o_ref, *, K, TH, Wo, Cin, tap_groups):
    # x_ref: (Hp, Wp, Cin)     full zero-padded image of one batch element
    #                          (resident across the H-tile axis -> one DMA/batch)
    # w_ref: (K*K*Cin, Coutp)  binarized weights (resident, single-buffered)
    # o_ref: (TH*Wo, Coutp)    flat output tile (no in-kernel reshape of acc)
    th_in = TH + K - 1
    row0 = pl.program_id(1) * TH
    slab = x_ref[pl.ds(row0, th_in), :, :]                  # (TH_in, Wp, Cin)

    def tap(kh, kw):                                        # (TH, Wo, Cin)
        return slab[kh:kh + TH, kw:kw + Wo, :]

    acc = None
    for group in tap_groups:          # static Python loop; groups reach >=256 depth
        depth = len(group) * Cin
        if len(group) == 1:
            kh, kw, r0 = group[0]
            patch = tap(kh, kw).reshape(TH * Wo, Cin)
        else:
            r0 = group[0][2]
            patch = jnp.concatenate(
                [tap(kh, kw) for kh, kw, _ in group], axis=-1
            ).reshape(TH * Wo, depth)
        w_g = w_ref[r0:r0 + depth, :]
        part = jnp.dot(patch, w_g, preferred_element_type=jnp.float32)
        acc = part if acc is None else acc + part
    o_ref[...] = acc.astype(o_ref.dtype)


# ---------------------------------------------------------------------------
# wrapper
# ---------------------------------------------------------------------------

def hard_binary_conv(x_nchw, weight_oihw, temperature, *, stride=1, groups=1,
                     compute_dtype=jnp.bfloat16, force_path=None, tile_rows=None):
    """HardBinaryConv.forward. x: NCHW, weight: OIHW, returns NCHW."""
    assert groups == 1  # TODO(synk): grouped conv (groups > 1) not implemented
    N, Cin, H, W = (int(s) for s in x_nchw.shape)
    Cout, Cin_g, K, K2 = (int(s) for s in weight_oihw.shape)
    assert K == K2 and Cin_g == Cin // groups
    padding = K // 2
    Ho = (H + 2 * padding - K) // stride + 1
    Wo = (W + 2 * padding - K) // stride + 1
    Wp = W + 2 * padding

    out_dtype = x_nchw.dtype
    budget, vmem_limit = _vmem_budget_and_limit()
    target_depth = _target_mxu_depth()

    # ---- weight binarization: once, in plain JAX, in f32 ----
    t = jnp.asarray(temperature, jnp.float32).reshape(())
    rw = jnp.clip(weight_oihw.astype(jnp.float32), -1.5, 1.5)       # clamp_(-1.5, 1.5)
    bw = jnp.clip(rw / jnp.maximum(t, 1e-8), -1.0, 1.0)
    bw = jnp.where(t < 1e-5, jnp.sign(bw), bw)                      # sign(0)=0, as torch

    # ---- output channels: pad to 128 lanes only when it is cheap (<= 2x) ----
    Coutp = _round_up(Cout, 128) if _round_up(Cout, 128) <= 2 * Cout else Cout
    w_hwio = jnp.transpose(bw, (2, 3, 1, 0))                        # (K, K, Cin, Cout)
    w_hwio = jnp.pad(w_hwio, ((0, 0), (0, 0), (0, 0), (0, Coutp - Cout)))
    w_flat = w_hwio.reshape(K * K * Cin, Coutp).astype(compute_dtype)

    # ---- path selection ----
    if force_path is None:
        use_im2col = (Cin < 64) or (stride > 1)
    else:
        use_im2col = (force_path == "im2col")
    # TODO(synk): stride>1 with large Cin should get a wrapper space-to-depth
    # split + the direct path instead of paying the K*K im2col HBM blow-up.

    x_nhwc = jnp.transpose(x_nchw, (0, 2, 3, 1)).astype(compute_dtype)

    if use_im2col:
        # =============== small-Cin / strided path: XLA im2col + matmul =======
        D = K * K * Cin
        Dp = _round_up(D, 128)                                      # lane-dense depth
        xp = jnp.pad(x_nhwc, ((0, 0), (padding, padding), (padding, padding), (0, 0)))
        h_hi = (Ho - 1) * stride + 1
        w_hi = (Wo - 1) * stride + 1
        taps = [xp[:, kh:kh + h_hi:stride, kw:kw + w_hi:stride, :]
                for kh in range(K) for kw in range(K)]
        patches = jnp.concatenate(taps, axis=-1).reshape(N * Ho * Wo, D)
        patches = jnp.pad(patches, ((0, 0), (0, Dp - D)))
        w_pad = jnp.pad(w_flat, ((0, Dp - D), (0, 0)))

        M = N * Ho * Wo
        w_bytes = _padded_bytes((Dp, Coutp), compute_dtype)          # single-buffered

        def bytes_for(tm):
            return (2 * _padded_bytes((tm, Dp), compute_dtype)       # patch (x2 buf)
                    + 2 * _padded_bytes((tm, Coutp), out_dtype)      # out   (x2 buf)
                    + _padded_bytes((tm, Coutp), jnp.float32)        # f32 acc value
                    + w_bytes)

        TM = min(_round_up(M, 8), 4096)
        while TM > 8 and bytes_for(TM) > budget:
            TM = _round_up(max(8, TM // 2), 8)
        if TM >= 256:
            TM = _round_down(TM, 256)                                # full MXU M passes
        TM = max(8, TM)
        Mp = _round_up(M, TM)
        patches = jnp.pad(patches, ((0, Mp - M), (0, 0)))

        out = pl.pallas_call(
            _matmul_kernel,
            out_shape=jax.ShapeDtypeStruct((Mp, Coutp), out_dtype),
            grid_spec=pltpu.PrefetchScalarGridSpec(
                num_scalar_prefetch=0,
                grid=(Mp // TM,),
                in_specs=[
                    pl.BlockSpec((TM, Dp), lambda m: (m, 0)),
                    # resident weights: constant index map + single buffer
                    pl.BlockSpec((Dp, Coutp), lambda m: (0, 0),
                                 pipeline_mode=pl.Buffered(1)),
                ],
                out_specs=pl.BlockSpec((TM, Coutp), lambda m: (m, 0)),
            ),
            compiler_params=pltpu.CompilerParams(
                dimension_semantics=("parallel",),
                vmem_limit_bytes=vmem_limit),
        )(patches, w_pad)

        out = out[:M, :Cout].reshape(N, Ho, Wo, Cout)
        return jnp.transpose(out, (0, 3, 1, 2))

    # =============== large-Cin path: resident image + in-kernel taps =========
    if stride != 1:
        raise NotImplementedError(
            "direct path requires stride == 1; strided layers take the im2col path")

    # taps per matmul so the contraction depth reaches the MXU target
    gs = max(1, min(K * K, -(-target_depth // Cin)))
    w_bytes = _padded_bytes((K * K * Cin, Coutp), compute_dtype)     # single-buffered

    def bytes_for(th):
        hp = _round_up(Ho, th) + K - 1
        img = 2 * _padded_bytes((hp, Wp, Cin), compute_dtype)        # image (x2 buf)
        outb = 2 * _padded_bytes((th * Wo, Coutp), out_dtype)        # out   (x2 buf)
        acc = _padded_bytes((th * Wo, Coutp), jnp.float32)
        patch = _padded_bytes((th * Wo, gs * Cin), compute_dtype)    # folded tap temp
        slab = _padded_bytes((th + K - 1, Wp, Cin), compute_dtype)   # in-kernel slab value
        return img + outb + acc + patch + slab + w_bytes

    q8 = 8 // math.gcd(Wo, 8)          # TH granularity so TH*Wo % 8 == 0
    q256 = 256 // math.gcd(Wo, 256)    # ideally TH*Wo % 256 == 0
    if tile_rows is not None:
        TH = max(1, min(int(tile_rows), Ho))
    else:
        TH = min(Ho, max(1, 4096 // max(Wo, 1)))                     # cap MXU M dim
        if TH >= q256:
            TH = _round_down(TH, q256)
        elif TH >= q8:
            TH = _round_down(TH, q8)
        while TH > q8 and bytes_for(TH) > budget:
            TH = _round_down(max(q8, TH // 2), q8)
        TH = max(1, min(TH, Ho))
    # TODO(synk): if the padded image itself does not fit the VMEM budget,
    # stream TH_in-row slabs from HBM (memory_space=pl.ANY) with a manual
    # double-buffered pltpu.make_async_copy pipeline instead.

    nT = -(-Ho // TH)
    Ho_pad = nT * TH
    Hp = Ho_pad + K - 1
    xp = jnp.pad(x_nhwc, ((0, 0), (padding, Hp - padding - H),
                          (padding, padding), (0, 0)))

    tap_list = [(kh, kw, (kh * K + kw) * Cin) for kh in range(K) for kw in range(K)]
    tap_groups = tuple(tuple(tap_list[i:i + gs]) for i in range(0, len(tap_list), gs))

    kernel = functools.partial(_direct_kernel, K=K, TH=TH, Wo=Wo, Cin=Cin,
                               tap_groups=tap_groups)

    out = pl.pallas_call(
        kernel,
        out_shape=jax.ShapeDtypeStruct((N, Ho_pad * Wo, Coutp), out_dtype),
        grid_spec=pltpu.PrefetchScalarGridSpec(
            num_scalar_prefetch=0,
            grid=(N, nT),
            in_specs=[
                # whole padded image of one batch element; constant over the
                # H-tile axis -> DMA'd once per batch, resident in VMEM.
                pl.BlockSpec((None, Hp, Wp, Cin), lambda n, tt: (n, 0, 0, 0)),
                # binarized weights: resident, single-buffered.
                pl.BlockSpec((K * K * Cin, Coutp), lambda n, tt: (0, 0),
                             pipeline_mode=pl.Buffered(1)),
            ],
            out_specs=pl.BlockSpec((None, TH * Wo, Coutp),
                                   lambda n, tt: (n, tt, 0)),
        ),
        compiler_params=pltpu.CompilerParams(
            dimension_semantics=("parallel", "parallel"),
            vmem_limit_bytes=vmem_limit),
    )(xp, w_flat)

    out = out[:, :Ho * Wo, :Cout].reshape(N, Ho, Wo, Cout)
    return jnp.transpose(out, (0, 3, 1, 2))


# ---------------------------------------------------------------------------
# self-test
# ---------------------------------------------------------------------------

if __name__ == "__main__":
    key = jax.random.PRNGKey(0)
    kx, kw = jax.random.split(key)

    # Small shapes consistent with the module: batch=2, in_chn=4, out_chn=8, 16x16.
    N, Cin, H, W = 2, 4, 16, 16
    Cout, K = 8, 3

    x = jax.random.normal(kx, (N, Cin, H, W), dtype=jnp.float32)
    # nn.Parameter(torch.randn(out, in//g, k, k) * 0.001), deterministic here.
    weight = jax.random.normal(kw, (Cout, Cin, K, K), dtype=jnp.float32) * 0.001
    temperature = jnp.ones((1,), dtype=jnp.float32)   # register_buffer('temperature')

    def torch_ref(xv, wv, tv):
        rw = jnp.clip(wv, -1.5, 1.5)
        bwr = jnp.clip(rw / jnp.maximum(tv[0], 1e-8), -1.0, 1.0)
        bwr = jnp.where(tv[0] < 1e-5, jnp.sign(bwr), bwr)
        return jax.lax.conv_general_dilated(
            xv, bwr, window_strides=(1, 1), padding=((1, 1), (1, 1)),
            dimension_numbers=("NCHW", "OIHW", "NCHW"))

    y_ref = torch_ref(x, weight, temperature)

    # 1) exact-f32, default path (im2col matmul, the small-Cin fast layout).
    y1 = jax.block_until_ready(
        hard_binary_conv(x, weight, temperature, compute_dtype=jnp.float32))
    assert y1.shape == (N, Cout, H, W)
    assert jnp.allclose(y1, y_ref, atol=1e-5, rtol=1e-5)

    # 2) exact-f32, forced direct path with explicit H tiling (grid (N, nT)).
    y2 = jax.block_until_ready(
        hard_binary_conv(x, weight, temperature, compute_dtype=jnp.float32,
                         force_path="direct", tile_rows=8))
    assert jnp.allclose(y2, y_ref, atol=1e-5, rtol=1e-5)

    # 3) eval-mode branch (temperature < 1e-5 -> sign()), f32 path.
    t_eval = jnp.full((1,), 1e-6, dtype=jnp.float32)
    y3 = jax.block_until_ready(
        hard_binary_conv(x, weight, t_eval, compute_dtype=jnp.float32))
    assert jnp.allclose(y3, torch_ref(x, weight, t_eval), atol=5e-3, rtol=1e-2)

    # 4) default bf16-MXU fast path; operand rounding -> looser tolerance.
    y4 = jax.block_until_ready(hard_binary_conv(x, weight, temperature))
    assert jnp.allclose(y4, y_ref, atol=2e-3, rtol=5e-2)

    print("KERNEL_OK")
</pallas_src>

<mosaic_0001>
module attributes {stable_mosaic.version = 11 : i64} {
  func.func @_matmul_kernel(%arg0: i32, %arg1: memref<512x128xf32, #tpu.memory_space<vmem>>, %arg2: memref<128x8xf32, #tpu.memory_space<vmem>>, %arg3: memref<512x8xf32, #tpu.memory_space<vmem>>) attributes {dimension_semantics = [#tpu.dimension_semantics<parallel>], iteration_bounds = array<i64: 1>, scalar_prefetch = 0 : i64, scratch_operands = 0 : i64, tpu.core_type = #tpu.core_type<tc>, window_params = [{transform_indices = @transform_0, window_bounds = array<i64: 512, 128>}, {pipeline_mode = #tpu.pipeline_mode<synchronous>, transform_indices = @transform_1, window_bounds = array<i64: 128, 8>}, {transform_indices = @transform_2, window_bounds = array<i64: 512, 8>}]} {
    %c0 = arith.constant 0 : index
    %c0_0 = arith.constant 0 : index
    %0 = vector.load %arg1[%c0, %c0_0] : memref<512x128xf32, #tpu.memory_space<vmem>>, vector<512x128xf32>
    %c0_1 = arith.constant 0 : index
    %c0_2 = arith.constant 0 : index
    %1 = vector.load %arg2[%c0_1, %c0_2] : memref<128x8xf32, #tpu.memory_space<vmem>>, vector<128x8xf32>
    %cst = arith.constant dense<0.000000e+00> : vector<512x8xf32>
    %2 = tpu.matmul %0, %1, %cst {dimension_numbers = #tpu.dot_dimension_numbers<[1], [0], [0], [1], [0, 0, 1, 1], [], []>} : vector<512x128xf32>, vector<128x8xf32>, vector<512x8xf32> -> vector<512x8xf32>
    %c0_3 = arith.constant 0 : index
    %c0_4 = arith.constant 0 : index
    %3 = vector.load %arg3[%c0_3, %c0_4] : memref<512x8xf32, #tpu.memory_space<vmem>>, vector<512x8xf32>
    tpu.vector_store %arg3[%c0_3, %c0_4], %2 {strides = array<i32>} : memref<512x8xf32, #tpu.memory_space<vmem>>, vector<512x8xf32>,
    return
  }
  func.func @transform_0(%arg0: i32) -> (i32, i32) {
    %c0_i32 = arith.constant 0 : i32
    %c0_i32_0 = arith.constant 0 : i32
    return %arg0, %c0_i32 : i32, i32
  }
  func.func @transform_1(%arg0: i32) -> (i32, i32) {
    %c0_i32 = arith.constant 0 : i32
    %c0_i32_0 = arith.constant 0 : i32
    %c0_i32_1 = arith.constant 0 : i32
    return %c0_i32, %c0_i32_0 : i32, i32
  }
  func.func @transform_2(%arg0: i32) -> (i32, i32) {
    %c0_i32 = arith.constant 0 : i32
    %c0_i32_0 = arith.constant 0 : i32
    return %arg0, %c0_i32 : i32, i32
  }
}

</mosaic_0001>

<llo_original>
// kernel: tpu_custom_call.1
$region0: #{tpu_custom_call.1}
  #allocation0 [shape = 'u32[]', space=smem, size = 0x4, offset = 0x4, fixed_abs, tag = 'smem constant byte address 0x4 - core index']
  #allocation1 [shape = 'u32[72,128]{1,0:T(1,128)}', space=vmem, size = 0x9000, scoped, tag = 'internal scratch']
  %s0 = inlined_call_operand.hbm [shape: f32[512,128], index: 0, kind: input, shape index: {}]
  %s1 = inlined_call_operand.vmem [shape: f32[128,8], index: 1, kind: input, shape index: {}]
  %s2 = inlined_call_operand.vmem [shape: f32[512,8], index: 2, kind: output, shape index: {}]
  %s3 = sld [smem:[#allocation0]]
  $region22: #{tpu_custom_call.1} parent=0
    _
  %s5 = ssub.s32 1, %s3
  %s6 = scalar_select 0, %s5, %s3
  $region1: #{tpu_custom_call.1} parent=0
    #allocation2 [shape = 'u8[262144]{0}', space=vmem, size = 0x40000, scoped, tag = 'input window, operand 0, single buffered']
    #allocation3 [shape = 's32[1]{0}', space=sflag, size = 0x4, scoped, tag = 'scoped memory for tpu_custom_call.1']
    %7 = vsyncpa [#allocation3], 0
    // Predicated region
    $region2: #{tpu_custom_call.1} parent=1 // pred_check
      _
    $region3: #{tpu_custom_call.1} parent=1 // pred_check_branch
      %9 = sbr.rel (0) target = $region5
    $region4: #{tpu_custom_call.1} parent=1 // pred_region
      %11 = vsyncadd [#allocation3], 0
      %s12 = sshll.u32 %s0, 4
      %s13 = int_to_ptr.hbm [resolvable:$true] %s12
      %s14 = sshll.u32 [#allocation2], 4
      %s15 = int_to_ptr.vmem [resolvable:$true] %s14
      %20 = dma.hbm_to_vmem [thread:$0]  %s13, 8192, %s15, [#allocation3], 128, 128, 8
    $region5: #{tpu_custom_call.1} parent=1 // pred_fallthru
      _
    // Predicated region
    $region6: #{tpu_custom_call.1} parent=1 // pred_check
      _
    $region7: #{tpu_custom_call.1} parent=1 // pred_check_branch
      %22 = sbr.rel (0) target = $region9
    $region8: #{tpu_custom_call.1} parent=1 // pred_region
      _
    $region9: #{tpu_custom_call.1} parent=1 // pred_fallthru
      _
    // Predicated region
    $region10: #{tpu_custom_call.1} parent=1 // pred_check
      _
    $region11: #{tpu_custom_call.1} parent=1 // pred_check_branch
      %24 = sbr.rel (0) target = $region13
    $region12: #{tpu_custom_call.1} parent=1 // pred_region
      %26 = dma.done [#allocation3], 8192
    $region13: #{tpu_custom_call.1} parent=1 // pred_fallthru
      _
    %v27 = vld [vmem:[#allocation2] sm:$0xff]
    %v28 = vld [vmem:[#allocation2 + $0x8] sm:$0xff]
    %v29 = vld [vmem:[#allocation2 + $0x10] sm:$0xff]
    %v30 = vld [vmem:[#allocation2 + $0x18] sm:$0xff]
    %v31 = vld [vmem:[#allocation2 + $0x20] sm:$0xff]
    %v32 = vld [vmem:[#allocation2 + $0x28] sm:$0xff]
    %v33 = vld [vmem:[#allocation2 + $0x30] sm:$0xff]
    %v34 = vld [vmem:[#allocation2 + $0x38] sm:$0xff]
    %v35 = vld [vmem:[#allocation2 + $0x40] sm:$0xff]
    %v36 = vld [vmem:[#allocation2 + $0x48] sm:$0xff]
    %v37 = vld [vmem:[#allocation2 + $0x50] sm:$0xff]
    %v38 = vld [vmem:[#allocation2 + $0x58] sm:$0xff]
    %v39 = vld [vmem:[#allocation2 + $0x60] sm:$0xff]
    %v40 = vld [vmem:[#allocation2 + $0x68] sm:$0xff]
    %v41 = vld [vmem:[#allocation2 + $0x70] sm:$0xff]
    %v42 = vld [vmem:[#allocation2 + $0x78] sm:$0xff]
    %v43 = vld [vmem:[#allocation2 + $0x80] sm:$0xff]
    %v44 = vld [vmem:[#allocation2 + $0x88] sm:$0xff]
    %v45 = vld [vmem:[#allocation2 + $0x90] sm:$0xff]
    %v46 = vld [vmem:[#allocation2 + $0x98] sm:$0xff]
    %v47 = vld [vmem:[#allocation2 + $0xa0] sm:$0xff]
    %v48 = vld [vmem:[#allocation2 + $0xa8] sm:$0xff]
    %v49 = vld [vmem:[#allocation2 + $0xb0] sm:$0xff]
    %v50 = vld [vmem:[#allocation2 + $0xb8] sm:$0xff]
    %v51 = vld [vmem:[#allocation2 + $0xc0] sm:$0xff]
    %v52 = vld [vmem:[#allocation2 + $0xc8] sm:$0xff]
    %v53 = vld [vmem:[#allocation2 + $0xd0] sm:$0xff]
    %v54 = vld [vmem:[#allocation2 + $0xd8] sm:$0xff]
    %v55 = vld [vmem:[#allocation2 + $0xe0] sm:$0xff]
    %v56 = vld [vmem:[#allocation2 + $0xe8] sm:$0xff]
    %v57 = vld [vmem:[#allocation2 + $0xf0] sm:$0xff]
    %v58 = vld [vmem:[#allocation2 + $0xf8] sm:$0xff]
    %v59 = vld [vmem:[#allocation2 + $0x100] sm:$0xff]
    %v60 = vld [vmem:[#allocation2 + $0x108] sm:$0xff]
    %v61 = vld [vmem:[#allocation2 + $0x110] sm:$0xff]
    %v62 = vld [vmem:[#allocation2 + $0x118] sm:$0xff]
    %v63 = vld [vmem:[#allocation2 + $0x120] sm:$0xff]
    %v64 = vld [vmem:[#allocation2 + $0x128] sm:$0xff]
    %v65 = vld [vmem:[#allocation2 + $0x130] sm:$0xff]
    %v66 = vld [vmem:[#allocation2 + $0x138] sm:$0xff]
    %v67 = vld [vmem:[#allocation2 + $0x140] sm:$0xff]
    %v68 = vld [vmem:[#allocation2 + $0x148] sm:$0xff]
    %v69 = vld [vmem:[#allocation2 + $0x150] sm:$0xff]
    %v70 = vld [vmem:[#allocation2 + $0x158] sm:$0xff]
    %v71 = vld [vmem:[#allocation2 + $0x160] sm:$0xff]
    %v72 = vld [vmem:[#allocation2 + $0x168] sm:$0xff]
    %v73 = vld [vmem:[#allocation2 + $0x170] sm:$0xff]
    %v74 = vld [vmem:[#allocation2 + $0x178] sm:$0xff]
    %v75 = vld [vmem:[#allocation2 + $0x180] sm:$0xff]
    %v76 = vld [vmem:[#allocation2 + $0x188] sm:$0xff]
    %v77 = vld [vmem:[#allocation2 + $0x190] sm:$0xff]
    %v78 = vld [vmem:[#allocation2 + $0x198] sm:$0xff]
    %v79 = vld [vmem:[#allocation2 + $0x1a0] sm:$0xff]
    %v80 = vld [vmem:[#allocation2 + $0x1a8] sm:$0xff]
    %v81 = vld [vmem:[#allocation2 + $0x1b0] sm:$0xff]
    %v82 = vld [vmem:[#allocation2 + $0x1b8] sm:$0xff]
    %v83 = vld [vmem:[#allocation2 + $0x1c0] sm:$0xff]
    %v84 = vld [vmem:[#allocation2 + $0x1c8] sm:$0xff]
    %v85 = vld [vmem:[#allocation2 + $0x1d0] sm:$0xff]
    %v86 = vld [vmem:[#allocation2 + $0x1d8] sm:$0xff]
    %v87 = vld [vmem:[#allocation2 + $0x1e0] sm:$0xff]
    %v88 = vld [vmem:[#allocation2 + $0x1e8] sm:$0xff]
    %v89 = vld [vmem:[#allocation2 + $0x1f0] sm:$0xff]
    %v90 = vld [vmem:[#allocation2 + $0x1f8] sm:$0xff]
    %v91 = vld [vmem:[%s1] sm:$0xff]
    %v92 = vld [vmem:[%s1 + $0x8] sm:$0xff]
    %v93 = vld [vmem:[%s1 + $0x10] sm:$0xff]
    %v94 = vld [vmem:[%s1 + $0x18] sm:$0xff]
    %v95 = vld [vmem:[%s1 + $0x20] sm:$0xff]
    %v96 = vld [vmem:[%s1 + $0x28] sm:$0xff]
    %v97 = vld [vmem:[%s1 + $0x30] sm:$0xff]
    %v98 = vld [vmem:[%s1 + $0x38] sm:$0xff]
    %v99 = vld [vmem:[%s1 + $0x40] sm:$0xff]
    %v100 = vld [vmem:[%s1 + $0x48] sm:$0xff]
    %v101 = vld [vmem:[%s1 + $0x50] sm:$0xff]
    %v102 = vld [vmem:[%s1 + $0x58] sm:$0xff]
    %v103 = vld [vmem:[%s1 + $0x60] sm:$0xff]
    %v104 = vld [vmem:[%s1 + $0x68] sm:$0xff]
    %v105 = vld [vmem:[%s1 + $0x70] sm:$0xff]
    %v106 = vld [vmem:[%s1 + $0x78] sm:$0xff]
    %107 = vmatpush.msra.mxu0 %v106
    %108 = vmatpush.msra.mxu0 %v105
    %109 = vmatpush.msra.mxu0 %v104
    %110 = vmatpush.msra.mxu0 %v103
    %111 = vmatpush.msra.mxu0 %v102
    %112 = vmatpush.msra.mxu0 %v101
    %113 = vmatpush.msra.mxu0 %v100
    %114 = vmatpush.msra.mxu0 %v99
    %115 = vmatpush.msra.mxu0 %v98
    %116 = vmatpush.msra.mxu0 %v97
    %117 = vmatpush.msra.mxu0 %v96
    %118 = vmatpush.msra.mxu0 %v95
    %119 = vmatpush.msra.mxu0 %v94
    %120 = vmatpush.msra.mxu0 %v93
    %121 = vmatpush.msra.mxu0 %v92
    %122 = vmatpush.msra.mxu0 %v91
    %123 = vmatmul.f32.gmra.mxu0 %v27
    %v124 = vpop.f32.mrf.mxu0
    %v125 = vadd.f32 0.0, %v124
    %126 = vmatmul.f32.gmra.mxu0 %v28
    %v127 = vpop.f32.mrf.mxu0
    %v128 = vadd.f32 0.0, %v127
    %129 = vmatmul.f32.gmra.mxu0 %v29
    %v130 = vpop.f32.mrf.mxu0
    %v131 = vadd.f32 0.0, %v130
    %132 = vmatmul.f32.gmra.mxu0 %v30
    %v133 = vpop.f32.mrf.mxu0
    %v134 = vadd.f32 0.0, %v133
    %135 = vmatmul.f32.gmra.mxu0 %v31
    %v136 = vpop.f32.mrf.mxu0
    %v137 = vadd.f32 0.0, %v136
    %138 = vmatmul.f32.gmra.mxu0 %v32
    %v139 = vpop.f32.mrf.mxu0
    %v140 = vadd.f32 0.0, %v139
    %141 = vmatmul.f32.gmra.mxu0 %v33
    %v142 = vpop.f32.mrf.mxu0
    %v143 = vadd.f32 0.0, %v142
    %144 = vmatmul.f32.gmra.mxu0 %v34
    %v145 = vpop.f32.mrf.mxu0
    %v146 = vadd.f32 0.0, %v145
    %147 = vmatmul.f32.gmra.mxu0 %v35
    %v148 = vpop.f32.mrf.mxu0
    %v149 = vadd.f32 0.0, %v148
    %150 = vmatmul.f32.gmra.mxu0 %v36
    %v151 = vpop.f32.mrf.mxu0
    %v152 = vadd.f32 0.0, %v151
    %153 = vmatmul.f32.gmra.mxu0 %v37
    %v154 = vpop.f32.mrf.mxu0
    %v155 = vadd.f32 0.0, %v154
    %156 = vmatmul.f32.gmra.mxu0 %v38
    %v157 = vpop.f32.mrf.mxu0
    %v158 = vadd.f32 0.0, %v157
    %159 = vmatmul.f32.gmra.mxu0 %v39
    %v160 = vpop.f32.mrf.mxu0
    %v161 = vadd.f32 0.0, %v160
    %162 = vmatmul.f32.gmra.mxu0 %v40
    %v163 = vpop.f32.mrf.mxu0
    %v164 = vadd.f32 0.0, %v163
    %165 = vmatmul.f32.gmra.mxu0 %v41
    %v166 = vpop.f32.mrf.mxu0
    %v167 = vadd.f32 0.0, %v166
    %168 = vmatmul.f32.gmra.mxu0 %v42
    %v169 = vpop.f32.mrf.mxu0
    %v170 = vadd.f32 0.0, %v169
    %171 = vmatmul.f32.gmra.mxu0 %v43
    %v172 = vpop.f32.mrf.mxu0
    %v173 = vadd.f32 0.0, %v172
    %174 = vmatmul.f32.gmra.mxu0 %v44
    %v175 = vpop.f32.mrf.mxu0
    %v176 = vadd.f32 0.0, %v175
    %177 = vmatmul.f32.gmra.mxu0 %v45
    %v178 = vpop.f32.mrf.mxu0
    %v179 = vadd.f32 0.0, %v178
    %180 = vmatmul.f32.gmra.mxu0 %v46
    %v181 = vpop.f32.mrf.mxu0
    %v182 = vadd.f32 0.0, %v181
    %183 = vmatmul.f32.gmra.mxu0 %v47
    %v184 = vpop.f32.mrf.mxu0
    %v185 = vadd.f32 0.0, %v184
    %186 = vmatmul.f32.gmra.mxu0 %v48
    %v187 = vpop.f32.mrf.mxu0
    %v188 = vadd.f32 0.0, %v187
    %189 = vmatmul.f32.gmra.mxu0 %v49
    %v190 = vpop.f32.mrf.mxu0
    %v191 = vadd.f32 0.0, %v190
    %192 = vmatmul.f32.gmra.mxu0 %v50
    %v193 = vpop.f32.mrf.mxu0
    %v194 = vadd.f32 0.0, %v193
    %195 = vmatmul.f32.gmra.mxu0 %v51
    %v196 = vpop.f32.mrf.mxu0
    %v197 = vadd.f32 0.0, %v196
    %198 = vmatmul.f32.gmra.mxu0 %v52
    %v199 = vpop.f32.mrf.mxu0
    %v200 = vadd.f32 0.0, %v199
    %201 = vmatmul.f32.gmra.mxu0 %v53
    %v202 = vpop.f32.mrf.mxu0
    %v203 = vadd.f32 0.0, %v202
    %204 = vmatmul.f32.gmra.mxu0 %v54
    %v205 = vpop.f32.mrf.mxu0
    %v206 = vadd.f32 0.0, %v205
    %207 = vmatmul.f32.gmra.mxu0 %v55
    %v208 = vpop.f32.mrf.mxu0
    %v209 = vadd.f32 0.0, %v208
    %210 = vmatmul.f32.gmra.mxu0 %v56
    %v211 = vpop.f32.mrf.mxu0
    %v212 = vadd.f32 0.0, %v211
    %213 = vmatmul.f32.gmra.mxu0 %v57
    %v214 = vpop.f32.mrf.mxu0
    %v215 = vadd.f32 0.0, %v214
    %216 = vmatmul.f32.gmra.mxu0 %v58
    %v217 = vpop.f32.mrf.mxu0
    %v218 = vadd.f32 0.0, %v217
    %219 = vmatmul.f32.gmra.mxu0 %v59
    %v220 = vpop.f32.mrf.mxu0
    %v221 = vadd.f32 0.0, %v220
    %222 = vmatmul.f32.gmra.mxu0 %v60
    %v223 = vpop.f32.mrf.mxu0
    %v224 = vadd.f32 0.0, %v223
    %225 = vmatmul.f32.gmra.mxu0 %v61
    %v226 = vpop.f32.mrf.mxu0
    %v227 = vadd.f32 0.0, %v226
    %228 = vmatmul.f32.gmra.mxu0 %v62
    %v229 = vpop.f32.mrf.mxu0
    %v230 = vadd.f32 0.0, %v229
    %231 = vmatmul.f32.gmra.mxu0 %v63
    %v232 = vpop.f32.mrf.mxu0
    %v233 = vadd.f32 0.0, %v232
    %234 = vmatmul.f32.gmra.mxu0 %v64
    %v235 = vpop.f32.mrf.mxu0
    %v236 = vadd.f32 0.0, %v235
    %237 = vmatmul.f32.gmra.mxu0 %v65
    %v238 = vpop.f32.mrf.mxu0
    %v239 = vadd.f32 0.0, %v238
    %240 = vmatmul.f32.gmra.mxu0 %v66
    %v241 = vpop.f32.mrf.mxu0
    %v242 = vadd.f32 0.0, %v241
    %243 = vmatmul.f32.gmra.mxu0 %v67
    %v244 = vpop.f32.mrf.mxu0
    %v245 = vadd.f32 0.0, %v244
    %246 = vmatmul.f32.gmra.mxu0 %v68
    %v247 = vpop.f32.mrf.mxu0
    %v248 = vadd.f32 0.0, %v247
    %249 = vmatmul.f32.gmra.mxu0 %v69
    %v250 = vpop.f32.mrf.mxu0
    %v251 = vadd.f32 0.0, %v250
    %252 = vmatmul.f32.gmra.mxu0 %v70
    %v253 = vpop.f32.mrf.mxu0
    %v254 = vadd.f32 0.0, %v253
    %255 = vmatmul.f32.gmra.mxu0 %v71
    %v256 = vpop.f32.mrf.mxu0
    %v257 = vadd.f32 0.0, %v256
    %258 = vmatmul.f32.gmra.mxu0 %v72
    %v259 = vpop.f32.mrf.mxu0
    %v260 = vadd.f32 0.0, %v259
    %261 = vmatmul.f32.gmra.mxu0 %v73
    %v262 = vpop.f32.mrf.mxu0
    %v263 = vadd.f32 0.0, %v262
    %264 = vmatmul.f32.gmra.mxu0 %v74
    %v265 = vpop.f32.mrf.mxu0
    %v266 = vadd.f32 0.0, %v265
    %267 = vmatmul.f32.gmra.mxu0 %v75
    %v268 = vpop.f32.mrf.mxu0
    %v269 = vadd.f32 0.0, %v268
    %270 = vmatmul.f32.gmra.mxu0 %v76
    %v271 = vpop.f32.mrf.mxu0
    %v272 = vadd.f32 0.0, %v271
    %273 = vmatmul.f32.gmra.mxu0 %v77
    %v274 = vpop.f32.mrf.mxu0
    %v275 = vadd.f32 0.0, %v274
    %276 = vmatmul.f32.gmra.mxu0 %v78
    %v277 = vpop.f32.mrf.mxu0
    %v278 = vadd.f32 0.0, %v277
    %279 = vmatmul.f32.gmra.mxu0 %v79
    %v280 = vpop.f32.mrf.mxu0
    %v281 = vadd.f32 0.0, %v280
    %282 = vmatmul.f32.gmra.mxu0 %v80
    %v283 = vpop.f32.mrf.mxu0
    %v284 = vadd.f32 0.0, %v283
    %285 = vmatmul.f32.gmra.mxu0 %v81
    %v286 = vpop.f32.mrf.mxu0
    %v287 = vadd.f32 0.0, %v286
    %288 = vmatmul.f32.gmra.mxu0 %v82
    %v289 = vpop.f32.mrf.mxu0
    %v290 = vadd.f32 0.0, %v289
    %291 = vmatmul.f32.gmra.mxu0 %v83
    %v292 = vpop.f32.mrf.mxu0
    %v293 = vadd.f32 0.0, %v292
    %294 = vmatmul.f32.gmra.mxu0 %v84
    %v295 = vpop.f32.mrf.mxu0
    %v296 = vadd.f32 0.0, %v295
    %297 = vmatmul.f32.gmra.mxu0 %v85
    %v298 = vpop.f32.mrf.mxu0
    %v299 = vadd.f32 0.0, %v298
    %300 = vmatmul.f32.gmra.mxu0 %v86
    %v301 = vpop.f32.mrf.mxu0
    %v302 = vadd.f32 0.0, %v301
    %303 = vmatmul.f32.gmra.mxu0 %v87
    %v304 = vpop.f32.mrf.mxu0
    %v305 = vadd.f32 0.0, %v304
    %306 = vmatmul.f32.gmra.mxu0 %v88
    %v307 = vpop.f32.mrf.mxu0
    %v308 = vadd.f32 0.0, %v307
    %309 = vmatmul.f32.gmra.mxu0 %v89
    %v310 = vpop.f32.mrf.mxu0
    %v311 = vadd.f32 0.0, %v310
    %312 = vmatmul.f32.gmra.mxu0 %v90
    %v313 = vpop.f32.mrf.mxu0
    %v314 = vadd.f32 0.0, %v313
    %315 = vdwg.mxu0
    %vm316 = vcmask 64512
    %317 = vst.msk [vmem:[%s2] sm:$0xff] %vm316, %v125
    %318 = vst.msk [vmem:[%s2 + $0x8] sm:$0xff] %vm316, %v128
    %319 = vst.msk [vmem:[%s2 + $0x10] sm:$0xff] %vm316, %v131
    %320 = vst.msk [vmem:[%s2 + $0x18] sm:$0xff] %vm316, %v134
    %321 = vst.msk [vmem:[%s2 + $0x20] sm:$0xff] %vm316, %v137
    %322 = vst.msk [vmem:[%s2 + $0x28] sm:$0xff] %vm316, %v140
    %323 = vst.msk [vmem:[%s2 + $0x30] sm:$0xff] %vm316, %v143
    %324 = vst.msk [vmem:[%s2 + $0x38] sm:$0xff] %vm316, %v146
    %325 = vst.msk [vmem:[%s2 + $0x40] sm:$0xff] %vm316, %v149
    %326 = vst.msk [vmem:[%s2 + $0x48] sm:$0xff] %vm316, %v152
    %327 = vst.msk [vmem:[%s2 + $0x50] sm:$0xff] %vm316, %v155
    %328 = vst.msk [vmem:[%s2 + $0x58] sm:$0xff] %vm316, %v158
    %329 = vst.msk [vmem:[%s2 + $0x60] sm:$0xff] %vm316, %v161
    %330 = vst.msk [vmem:[%s2 + $0x68] sm:$0xff] %vm316, %v164
    %331 = vst.msk [vmem:[%s2 + $0x70] sm:$0xff] %vm316, %v167
    %332 = vst.msk [vmem:[%s2 + $0x78] sm:$0xff] %vm316, %v170
    %333 = vst.msk [vmem:[%s2 + $0x80] sm:$0xff] %vm316, %v173
    %334 = vst.msk [vmem:[%s2 + $0x88] sm:$0xff] %vm316, %v176
    %335 = vst.msk [vmem:[%s2 + $0x90] sm:$0xff] %vm316, %v179
    %336 = vst.msk [vmem:[%s2 + $0x98] sm:$0xff] %vm316, %v182
    %337 = vst.msk [vmem:[%s2 + $0xa0] sm:$0xff] %vm316, %v185
    %338 = vst.msk [vmem:[%s2 + $0xa8] sm:$0xff] %vm316, %v188
    %339 = vst.msk [vmem:[%s2 + $0xb0] sm:$0xff] %vm316, %v191
    %340 = vst.msk [vmem:[%s2 + $0xb8] sm:$0xff] %vm316, %v194
    %341 = vst.msk [vmem:[%s2 + $0xc0] sm:$0xff] %vm316, %v197
    %342 = vst.msk [vmem:[%s2 + $0xc8] sm:$0xff] %vm316, %v200
    %343 = vst.msk [vmem:[%s2 + $0xd0] sm:$0xff] %vm316, %v203
    %344 = vst.msk [vmem:[%s2 + $0xd8] sm:$0xff] %vm316, %v206
    %345 = vst.msk [vmem:[%s2 + $0xe0] sm:$0xff] %vm316, %v209
    %346 = vst.msk [vmem:[%s2 + $0xe8] sm:$0xff] %vm316, %v212
    %347 = vst.msk [vmem:[%s2 + $0xf0] sm:$0xff] %vm316, %v215
    %348 = vst.msk [vmem:[%s2 + $0xf8] sm:$0xff] %vm316, %v218
    %349 = vst.msk [vmem:[%s2 + $0x100] sm:$0xff] %vm316, %v221
    %350 = vst.msk [vmem:[%s2 + $0x108] sm:$0xff] %vm316, %v224
    %351 = vst.msk [vmem:[%s2 + $0x110] sm:$0xff] %vm316, %v227
    %352 = vst.msk [vmem:[%s2 + $0x118] sm:$0xff] %vm316, %v230
    %353 = vst.msk [vmem:[%s2 + $0x120] sm:$0xff] %vm316, %v233
    %354 = vst.msk [vmem:[%s2 + $0x128] sm:$0xff] %vm316, %v236
    %355 = vst.msk [vmem:[%s2 + $0x130] sm:$0xff] %vm316, %v239
    %356 = vst.msk [vmem:[%s2 + $0x138] sm:$0xff] %vm316, %v242
    %357 = vst.msk [vmem:[%s2 + $0x140] sm:$0xff] %vm316, %v245
    %358 = vst.msk [vmem:[%s2 + $0x148] sm:$0xff] %vm316, %v248
    %359 = vst.msk [vmem:[%s2 + $0x150] sm:$0xff] %vm316, %v251
    %360 = vst.msk [vmem:[%s2 + $0x158] sm:$0xff] %vm316, %v254
    %361 = vst.msk [vmem:[%s2 + $0x160] sm:$0xff] %vm316, %v257
    %362 = vst.msk [vmem:[%s2 + $0x168] sm:$0xff] %vm316, %v260
    %363 = vst.msk [vmem:[%s2 + $0x170] sm:$0xff] %vm316, %v263
    %364 = vst.msk [vmem:[%s2 + $0x178] sm:$0xff] %vm316, %v266
    %365 = vst.msk [vmem:[%s2 + $0x180] sm:$0xff] %vm316, %v269
    %366 = vst.msk [vmem:[%s2 + $0x188] sm:$0xff] %vm316, %v272
    %367 = vst.msk [vmem:[%s2 + $0x190] sm:$0xff] %vm316, %v275
    %368 = vst.msk [vmem:[%s2 + $0x198] sm:$0xff] %vm316, %v278
    %369 = vst.msk [vmem:[%s2 + $0x1a0] sm:$0xff] %vm316, %v281
    %370 = vst.msk [vmem:[%s2 + $0x1a8] sm:$0xff] %vm316, %v284
    %371 = vst.msk [vmem:[%s2 + $0x1b0] sm:$0xff] %vm316, %v287
    %372 = vst.msk [vmem:[%s2 + $0x1b8] sm:$0xff] %vm316, %v290
    %373 = vst.msk [vmem:[%s2 + $0x1c0] sm:$0xff] %vm316, %v293
    %374 = vst.msk [vmem:[%s2 + $0x1c8] sm:$0xff] %vm316, %v296
    %375 = vst.msk [vmem:[%s2 + $0x1d0] sm:$0xff] %vm316, %v299
    %376 = vst.msk [vmem:[%s2 + $0x1d8] sm:$0xff] %vm316, %v302
    %377 = vst.msk [vmem:[%s2 + $0x1e0] sm:$0xff] %vm316, %v305
    %378 = vst.msk [vmem:[%s2 + $0x1e8] sm:$0xff] %vm316, %v308
    %379 = vst.msk [vmem:[%s2 + $0x1f0] sm:$0xff] %vm316, %v311
    %380 = vst.msk [vmem:[%s2 + $0x1f8] sm:$0xff] %vm316, %v314
    // Predicated region
    $region14: #{tpu_custom_call.1} parent=1 // pred_check
      _
    $region15: #{tpu_custom_call.1} parent=1 // pred_check_branch
      %382 = sbr.rel (0) target = $region17
    $region16: #{tpu_custom_call.1} parent=1 // pred_region
      _
    $region17: #{tpu_custom_call.1} parent=1 // pred_fallthru
      _
    // Predicated region
    $region18: #{tpu_custom_call.1} parent=1 // pred_check
      _
    $region19: #{tpu_custom_call.1} parent=1 // pred_check_branch
      %384 = sbr.rel (0) target = $region21
    $region20: #{tpu_custom_call.1} parent=1 // pred_region
      _
    $region21: #{tpu_custom_call.1} parent=1 // pred_fallthru
      _
    %385 = vsyncpa [#allocation3], 1

</llo_original>
